<compile_context>
chip_gen: v7x
topology: tpu7x:2x2x1
jax: 0.10.0
libtpu: 0.0.40
codegen_flags: <defaults>
</compile_context>

<pallas_src>
import jax
import jax.numpy as jnp
from jax.experimental import pallas as pl
from jax.experimental.pallas import tpu as pltpu


_TARGET_BLOCK_BYTES = 1 << 20          # ~1 MiB per big operand per grid step
_HAS_INKERNEL_RNG = hasattr(pltpu, "prng_seed") and hasattr(pltpu, "stateful_normal")


def _round_up(x: int, m: int) -> int:
    return -(-x // m) * m


def _plan_layout(batch: int, per_image: int, itemsize: int):
    """Choose a sublane/lane-dense 2-D layout and block size.

    Returns (lane_blk, p_pad, rows_per_img, total_rows, rows_pad, row_blk).
    """
    # Lane width: largest "nice" multiple of 128 dividing the flattened image
    # so the reshape is layout-preserving (no copy); otherwise fall back to
    # 128 and zero-pad the image (one extra copy, correctness preserved).
    lane_blk = 128
    for cand in (2048, 1024, 512, 256, 128):
        if per_image % cand == 0:
            lane_blk = cand
            break
    p_pad = _round_up(per_image, lane_blk)
    rows_per_img = p_pad // lane_blk
    total_rows = batch * rows_per_img
    rows_pad = _round_up(total_rows, 8)

    # Row block: multiple of 8, divides rows_pad, ~1 MiB per operand, and
    # leaves >= 2 grid steps when possible (keeps both v7x TensorCores busy).
    budget_rows = max(8, (_TARGET_BLOCK_BYTES // (itemsize * lane_blk)) // 8 * 8)
    if rows_pad >= 16:
        max_rb = max(8, min(budget_rows, (rows_pad // 2) // 8 * 8))
    else:
        max_rb = max(8, min(budget_rows, rows_pad))
    row_blk = 8
    for cand in range(max_rb, 7, -8):
        if rows_pad % cand == 0:
            row_blk = cand
            break
    return lane_blk, p_pad, rows_per_img, total_rows, rows_pad, row_blk


def _to_rows(x, per_image, lane_blk, p_pad, rows_pad):
    """(B, C, H, W) -> zero-padded (rows_pad, lane_blk) slab."""
    b = x.shape[0]
    x2 = x.reshape(b, per_image)
    if p_pad != per_image:
        x2 = jnp.pad(x2, ((0, 0), (0, p_pad - per_image)))
    rows = x2.reshape(b * (p_pad // lane_blk), lane_blk)
    if rows_pad != rows.shape[0]:
        rows = jnp.pad(rows, ((0, rows_pad - rows.shape[0]), (0, 0)))
    return rows


def _from_rows(rows, shape, per_image, p_pad, total_rows):
    b = shape[0]
    return rows[:total_rows].reshape(b, p_pad)[:, :per_image].reshape(shape)


def _row_scales(sqrt_ab, sqrt_1m_ab, rows_per_img, total_rows, rows_pad):
    sa = jnp.repeat(sqrt_ab.astype(jnp.float32), rows_per_img)
    sb = jnp.repeat(sqrt_1m_ab.astype(jnp.float32), rows_per_img)
    if rows_pad != total_rows:
        pad = rows_pad - total_rows
        sa = jnp.pad(sa, (0, pad))
        sb = jnp.pad(sb, (0, pad))
    return sa.reshape(rows_pad, 1), sb.reshape(rows_pad, 1)


# --------------------------------------------------------------------------
# Kernels
# --------------------------------------------------------------------------
def _q_sample_kernel(sa_ref, sb_ref, x0_ref, eps_ref, xt_ref):
    """xt = sa * x0 + sb * eps   (noise supplied by the caller)."""
    x0 = x0_ref[...].astype(jnp.float32)
    eps = eps_ref[...].astype(jnp.float32)
    xt_ref[...] = (sa_ref[...] * x0 + sb_ref[...] * eps).astype(xt_ref.dtype)


def _q_sample_rng_kernel(seed_ref, sa_ref, sb_ref, x0_ref, noise_ref, xt_ref):
    """Noise is drawn in-kernel with the TPU PRNG and emitted as an output."""
    pltpu.prng_seed(seed_ref[0], pl.program_id(0))
    eps = pltpu.stateful_normal(x0_ref.shape, jnp.float32)
    noise_ref[...] = eps.astype(noise_ref.dtype)
    x0 = x0_ref[...].astype(jnp.float32)
    xt_ref[...] = (sa_ref[...] * x0 + sb_ref[...] * eps).astype(xt_ref.dtype)


# --------------------------------------------------------------------------
# Wrappers
# --------------------------------------------------------------------------
def q_sample_pallas(x0, noise, t, alpha_bar):
    """xt = sqrt(alpha_bar[t]) * x0 + sqrt(1 - alpha_bar[t]) * noise."""
    b, c, h, w = x0.shape
    per_image = c * h * w
    lane_blk, p_pad, rpi, total_rows, rows_pad, row_blk = _plan_layout(
        b, per_image, x0.dtype.itemsize)

    ab = alpha_bar[t]
    sa_rows, sb_rows = _row_scales(jnp.sqrt(ab), jnp.sqrt(1.0 - ab),
                                   rpi, total_rows, rows_pad)
    x_rows = _to_rows(x0, per_image, lane_blk, p_pad, rows_pad)
    e_rows = _to_rows(noise, per_image, lane_blk, p_pad, rows_pad)

    grid = (rows_pad // row_blk,)
    data_spec = pl.BlockSpec((row_blk, lane_blk), lambda r: (r, 0))
    scale_spec = pl.BlockSpec((row_blk, 1), lambda r: (r, 0))

    xt_rows = pl.pallas_call(
        _q_sample_kernel,
        out_shape=jax.ShapeDtypeStruct((rows_pad, lane_blk), x0.dtype),
        grid_spec=pltpu.PrefetchScalarGridSpec(
            num_scalar_prefetch=0,
            grid=grid,
            in_specs=[scale_spec, scale_spec, data_spec, data_spec],
            out_specs=data_spec,
        ),
        compiler_params=pltpu.CompilerParams(
            dimension_semantics=("parallel",)),
    )(sa_rows, sb_rows, x_rows, e_rows)

    return _from_rows(xt_rows, x0.shape, per_image, p_pad, total_rows)


def q_sample_rng_pallas(x0, t, alpha_bar, seed):
    """Like q_sample_pallas but N(0,1) noise is generated inside the kernel.

    Returns (noise, xt). Saves a full HBM read of the noise tensor plus the
    separate XLA rng dispatch; the stream differs from jax.random (fine for
    training noise).
    """
    b, c, h, w = x0.shape
    per_image = c * h * w
    lane_blk, p_pad, rpi, total_rows, rows_pad, row_blk = _plan_layout(
        b, per_image, x0.dtype.itemsize)

    ab = alpha_bar[t]
    sa_rows, sb_rows = _row_scales(jnp.sqrt(ab), jnp.sqrt(1.0 - ab),
                                   rpi, total_rows, rows_pad)
    x_rows = _to_rows(x0, per_image, lane_blk, p_pad, rows_pad)

    grid = (rows_pad // row_blk,)
    # num_scalar_prefetch=1 -> index maps receive the SMEM seed ref as a
    # trailing positional arg.
    data_spec = pl.BlockSpec((row_blk, lane_blk), lambda r, seed_ref: (r, 0))
    scale_spec = pl.BlockSpec((row_blk, 1), lambda r, seed_ref: (r, 0))

    seed_arr = jnp.asarray(seed, dtype=jnp.int32).reshape(1)

    noise_rows, xt_rows = pl.pallas_call(
        _q_sample_rng_kernel,
        out_shape=(
            jax.ShapeDtypeStruct((rows_pad, lane_blk), x0.dtype),
            jax.ShapeDtypeStruct((rows_pad, lane_blk), x0.dtype),
        ),
        grid_spec=pltpu.PrefetchScalarGridSpec(
            num_scalar_prefetch=1,
            grid=grid,
            in_specs=[scale_spec, scale_spec, data_spec],
            out_specs=(data_spec, data_spec),
        ),
        compiler_params=pltpu.CompilerParams(
            dimension_semantics=("parallel",)),
    )(seed_arr, sa_rows, sb_rows, x_rows)

    noise = _from_rows(noise_rows, x0.shape, per_image, p_pad, total_rows)
    xt = _from_rows(xt_rows, x0.shape, per_image, p_pad, total_rows)
    return noise, xt


class DiffusionPallas:
    """JAX/Pallas port of src/DDPM.py::Diffusion (forward / q_sample path)."""

    def __init__(self, n_steps: int, n_samples: int = 1):
        self.n_steps = n_steps
        self.n_samples = n_samples
        self.beta = jnp.linspace(0.0001, 0.02, n_steps, dtype=jnp.float32)
        self.alpha = 1.0 - self.beta
        self.alpha_bar = jnp.cumprod(self.alpha, axis=0)
        self.sigma2 = self.beta
        # TODO(synk): sample()/p_sample() drive an external eps_model in a
        # host-side reverse-diffusion loop; not expressible as one kernel.

    def q_xt_x0(self, x0, t):
        ab = self.alpha_bar[t].reshape(-1, 1, 1, 1)
        return jnp.sqrt(ab) * x0, 1.0 - ab

    def forward(self, x0, key, noise=None):
        batch_size = x0.shape[0]
        k_t, k_noise = jax.random.split(key)
        t = jax.random.randint(k_t, (batch_size,), 0, self.n_steps,
                               dtype=jnp.int32)
        if noise is None and _HAS_INKERNEL_RNG:
            seed = jax.random.randint(k_noise, (), 0,
                                      jnp.iinfo(jnp.int32).max,
                                      dtype=jnp.int32)
            try:
                noise, xt = q_sample_rng_pallas(x0, t, self.alpha_bar, seed)
                return noise, xt, t
            except Exception:
                # Fall back to the explicit-noise kernel if in-kernel RNG
                # is unavailable on this jax/libtpu build.
                noise = None
        if noise is None:
            noise = jax.random.normal(k_noise, x0.shape, dtype=x0.dtype)
        xt = q_sample_pallas(x0, noise, t, self.alpha_bar)
        return noise, xt, t


if __name__ == "__main__":
    key = jax.random.PRNGKey(0)
    k_x0, k_fwd1, k_fwd2, k_eps = jax.random.split(key, 4)

    B, C, H, W = 2, 4, 16, 16
    n_steps = 100
    x0 = jax.random.normal(k_x0, (B, C, H, W), dtype=jnp.float32)

    diffusion = DiffusionPallas(n_steps=n_steps)

    # Path 1: noise generated inside the kernel (auto-fallback if unsupported).
    noise1, xt1, t1 = diffusion.forward(x0, k_fwd1)
    jax.block_until_ready(xt1)
    assert noise1.shape == x0.shape and xt1.shape == x0.shape and t1.shape == (B,)
    ab1 = diffusion.alpha_bar[t1].reshape(-1, 1, 1, 1)
    xt1_ref = jnp.sqrt(ab1) * x0 + jnp.sqrt(1.0 - ab1) * noise1
    assert jnp.allclose(xt1, xt1_ref, atol=1e-5, rtol=1e-5), "path-1 mismatch"

    # Path 2: caller-provided noise (explicit-eps kernel).
    noise_in = jax.random.normal(k_eps, (B, C, H, W), dtype=jnp.float32)
    noise2, xt2, t2 = diffusion.forward(x0, k_fwd2, noise=noise_in)
    jax.block_until_ready(xt2)
    ab2 = diffusion.alpha_bar[t2].reshape(-1, 1, 1, 1)
    xt2_ref = jnp.sqrt(ab2) * x0 + jnp.sqrt(1.0 - ab2) * noise_in
    assert jnp.allclose(noise2, noise_in)
    assert jnp.allclose(xt2, xt2_ref, atol=1e-5, rtol=1e-5), "path-2 mismatch"

    print("KERNEL_OK")
</pallas_src>

<mosaic_0001>
module attributes {stable_mosaic.version = 11 : i64} {
  func.func @_q_sample_rng_kernel(%arg0: i32, %arg1: memref<1xi32, #tpu.memory_space<smem>>, %arg2: memref<8x1xf32, #tpu.memory_space<vmem>>, %arg3: memref<8x1xf32, #tpu.memory_space<vmem>>, %arg4: memref<8x1024xf32, #tpu.memory_space<vmem>>, %arg5: memref<8x1024xf32, #tpu.memory_space<vmem>>, %arg6: memref<8x1024xf32, #tpu.memory_space<vmem>>) attributes {dimension_semantics = [#tpu.dimension_semantics<parallel>], iteration_bounds = array<i64: 1>, scalar_prefetch = 1 : i64, scratch_operands = 0 : i64, tpu.core_type = #tpu.core_type<tc>, window_params = [{transform_indices = @transform_0, window_bounds = array<i64: 8, 1>}, {transform_indices = @transform_1, window_bounds = array<i64: 8, 1>}, {transform_indices = @transform_2, window_bounds = array<i64: 8, 1024>}, {transform_indices = @transform_3, window_bounds = array<i64: 8, 1024>}, {transform_indices = @transform_4, window_bounds = array<i64: 8, 1024>}]} {
    %c0 = arith.constant 0 : index
    %0 = memref.load %arg1[%c0] : memref<1xi32, #tpu.memory_space<smem>>
    "tpu.prng_set_seed_32"(%0, %arg0) : (i32, i32) -> ()
    %c0_i32 = arith.constant 0 : i32
    %c0_i32_0 = arith.constant 0 : i32
    %cst = arith.constant -0.99999994 : f32
    %cst_1 = arith.constant 1.000000e+00 : f32
    %1 = vector.broadcast %cst : f32 to vector<1x1xf32>
    %2 = vector.broadcast %cst_1 : f32 to vector<1x1xf32>
    %3 = "tpu.prng_random_bits"() : () -> vector<8x1024xi32>
    %c9_i32 = arith.constant 9 : i32
    %4 = vector.broadcast %c9_i32 : i32 to vector<8x1024xi32>
    %5 = arith.shrui %3, %4 : vector<8x1024xi32>
    %c1065353216_i32 = arith.constant 1065353216 : i32
    %6 = vector.broadcast %c1065353216_i32 : i32 to vector<8x1024xi32>
    %7 = arith.ori %5, %6 : vector<8x1024xi32>
    %8 = tpu.bitcast %7 : vector<8x1024xi32> -> vector<8x1024xf32>
    %cst_2 = arith.constant 1.000000e+00 : f32
    %9 = vector.broadcast %cst_2 : f32 to vector<8x1024xf32>
    %10 = arith.subf %8, %9 : vector<8x1024xf32>
    %11 = arith.subf %2, %1 : vector<1x1xf32>
    %12 = vector.broadcast %11 : vector<1x1xf32> to vector<8x1024xf32>
    %13 = arith.mulf %10, %12 : vector<8x1024xf32>
    %14 = vector.broadcast %1 : vector<1x1xf32> to vector<8x1024xf32>
    %15 = arith.addf %13, %14 : vector<8x1024xf32>
    %16 = vector.broadcast %1 : vector<1x1xf32> to vector<8x1024xf32>
    %17 = arith.maximumf %16, %15 : vector<8x1024xf32>
    %cst_3 = arith.constant 0.000000e+00 : f32
    %18 = vector.broadcast %cst_3 : f32 to vector<8x1024xf32>
    %19 = arith.subf %18, %17 : vector<8x1024xf32>
    %20 = arith.mulf %17, %19 : vector<8x1024xf32>
    %21 = math.log1p %20 : vector<8x1024xf32>
    %cst_4 = arith.constant 0.000000e+00 : f32
    %22 = vector.broadcast %cst_4 : f32 to vector<8x1024xf32>
    %23 = arith.subf %22, %21 : vector<8x1024xf32>
    %cst_5 = arith.constant 5.000000e+00 : f32
    %24 = vector.broadcast %cst_5 : f32 to vector<8x1024xf32>
    %25 = arith.cmpf olt, %23, %24 : vector<8x1024xf32>
    %cst_6 = arith.constant 2.500000e+00 : f32
    %26 = vector.broadcast %cst_6 : f32 to vector<8x1024xf32>
    %27 = arith.subf %23, %26 : vector<8x1024xf32>
    %28 = math.sqrt %23 : vector<8x1024xf32>
    %cst_7 = arith.constant 3.000000e+00 : f32
    %29 = vector.broadcast %cst_7 : f32 to vector<8x1024xf32>
    %30 = arith.subf %28, %29 : vector<8x1024xf32>
    %31 = arith.select %25, %27, %30 : vector<8x1024xi1>, vector<8x1024xf32>
    %cst_8 = arith.constant 2.81022636E-8 : f32
    %cst_9 = arith.constant -2.00214257E-4 : f32
    %32 = vector.broadcast %cst_8 : f32 to vector<8x1024xf32>
    %33 = vector.broadcast %cst_9 : f32 to vector<8x1024xf32>
    %34 = arith.select %25, %32, %33 : vector<8x1024xi1>, vector<8x1024xf32>
    %cst_10 = arith.constant 3.43273939E-7 : f32
    %cst_11 = arith.constant 1.00950558E-4 : f32
    %35 = vector.broadcast %cst_10 : f32 to vector<8x1024xf32>
    %36 = vector.broadcast %cst_11 : f32 to vector<8x1024xf32>
    %37 = arith.select %25, %35, %36 : vector<8x1024xi1>, vector<8x1024xf32>
    %38 = arith.mulf %34, %31 : vector<8x1024xf32>
    %39 = arith.addf %37, %38 : vector<8x1024xf32>
    %cst_12 = arith.constant -3.5233877E-6 : f32
    %cst_13 = arith.constant 0.00134934322 : f32
    %40 = vector.broadcast %cst_12 : f32 to vector<8x1024xf32>
    %41 = vector.broadcast %cst_13 : f32 to vector<8x1024xf32>
    %42 = arith.select %25, %40, %41 : vector<8x1024xi1>, vector<8x1024xf32>
    %43 = arith.mulf %39, %31 : vector<8x1024xf32>
    %44 = arith.addf %42, %43 : vector<8x1024xf32>
    %cst_14 = arith.constant -4.39150654E-6 : f32
    %cst_15 = arith.constant -0.00367342844 : f32
    %45 = vector.broadcast %cst_14 : f32 to vector<8x1024xf32>
    %46 = vector.broadcast %cst_15 : f32 to vector<8x1024xf32>
    %47 = arith.select %25, %45, %46 : vector<8x1024xi1>, vector<8x1024xf32>
    %48 = arith.mulf %44, %31 : vector<8x1024xf32>
    %49 = arith.addf %47, %48 : vector<8x1024xf32>
    %cst_16 = arith.constant 2.1858087E-4 : f32
    %cst_17 = arith.constant 0.00573950773 : f32
    %50 = vector.broadcast %cst_16 : f32 to vector<8x1024xf32>
    %51 = vector.broadcast %cst_17 : f32 to vector<8x1024xf32>
    %52 = arith.select %25, %50, %51 : vector<8x1024xi1>, vector<8x1024xf32>
    %53 = arith.mulf %49, %31 : vector<8x1024xf32>
    %54 = arith.addf %52, %53 : vector<8x1024xf32>
    %cst_18 = arith.constant -0.00125372503 : f32
    %cst_19 = arith.constant -0.0076224613 : f32
    %55 = vector.broadcast %cst_18 : f32 to vector<8x1024xf32>
    %56 = vector.broadcast %cst_19 : f32 to vector<8x1024xf32>
    %57 = arith.select %25, %55, %56 : vector<8x1024xi1>, vector<8x1024xf32>
    %58 = arith.mulf %54, %31 : vector<8x1024xf32>
    %59 = arith.addf %57, %58 : vector<8x1024xf32>
    %cst_20 = arith.constant -0.00417768164 : f32
    %cst_21 = arith.constant 0.00943887047 : f32
    %60 = vector.broadcast %cst_20 : f32 to vector<8x1024xf32>
    %61 = vector.broadcast %cst_21 : f32 to vector<8x1024xf32>
    %62 = arith.select %25, %60, %61 : vector<8x1024xi1>, vector<8x1024xf32>
    %63 = arith.mulf %59, %31 : vector<8x1024xf32>
    %64 = arith.addf %62, %63 : vector<8x1024xf32>
    %cst_22 = arith.constant 0.246640727 : f32
    %cst_23 = arith.constant 1.00167406 : f32
    %65 = vector.broadcast %cst_22 : f32 to vector<8x1024xf32>
    %66 = vector.broadcast %cst_23 : f32 to vector<8x1024xf32>
    %67 = arith.select %25, %65, %66 : vector<8x1024xi1>, vector<8x1024xf32>
    %68 = arith.mulf %64, %31 : vector<8x1024xf32>
    %69 = arith.addf %67, %68 : vector<8x1024xf32>
    %cst_24 = arith.constant 1.50140941 : f32
    %cst_25 = arith.constant 2.83297682 : f32
    %70 = vector.broadcast %cst_24 : f32 to vector<8x1024xf32>
    %71 = vector.broadcast %cst_25 : f32 to vector<8x1024xf32>
    %72 = arith.select %25, %70, %71 : vector<8x1024xi1>, vector<8x1024xf32>
    %73 = arith.mulf %69, %31 : vector<8x1024xf32>
    %74 = arith.addf %72, %73 : vector<8x1024xf32>
    %75 = math.absf %17 : vector<8x1024xf32>
    %cst_26 = arith.constant 1.000000e+00 : f32
    %76 = vector.broadcast %cst_26 : f32 to vector<8x1024xf32>
    %77 = arith.cmpf oeq, %75, %76 : vector<8x1024xf32>
    %cst_27 = arith.constant 0x7F800000 : f32
    %78 = vector.broadcast %cst_27 : f32 to vector<8x1024xf32>
    %79 = arith.mulf %78, %17 : vector<8x1024xf32>
    %80 = arith.mulf %74, %17 : vector<8x1024xf32>
    %81 = arith.select %77, %79, %80 : vector<8x1024xi1>, vector<8x1024xf32>
    %cst_28 = arith.constant 1.41421354 : f32
    %82 = vector.broadcast %cst_28 : f32 to vector<8x1024xf32>
    %83 = arith.mulf %82, %81 : vector<8x1024xf32>
    %c0_29 = arith.constant 0 : index
    %c0_30 = arith.constant 0 : index
    %84 = vector.load %arg5[%c0_29, %c0_30] : memref<8x1024xf32, #tpu.memory_space<vmem>>, vector<8x1024xf32>
    tpu.vector_store %arg5[%c0_29, %c0_30], %83 {strides = array<i32>} : memref<8x1024xf32, #tpu.memory_space<vmem>>, vector<8x1024xf32>,
    %c0_31 = arith.constant 0 : index
    %c0_32 = arith.constant 0 : index
    %85 = vector.load %arg4[%c0_31, %c0_32] : memref<8x1024xf32, #tpu.memory_space<vmem>>, vector<8x1024xf32>
    %c0_33 = arith.constant 0 : index
    %c0_34 = arith.constant 0 : index
    %86 = vector.load %arg2[%c0_33, %c0_34] : memref<8x1xf32, #tpu.memory_space<vmem>>, vector<8x1xf32>
    %87 = vector.broadcast %86 : vector<8x1xf32> to vector<8x1024xf32>
    %88 = arith.mulf %87, %85 : vector<8x1024xf32>
    %c0_35 = arith.constant 0 : index
    %c0_36 = arith.constant 0 : index
    %89 = vector.load %arg3[%c0_35, %c0_36] : memref<8x1xf32, #tpu.memory_space<vmem>>, vector<8x1xf32>
    %90 = vector.broadcast %89 : vector<8x1xf32> to vector<8x1024xf32>
    %91 = arith.mulf %90, %83 : vector<8x1024xf32>
    %92 = arith.addf %88, %91 : vector<8x1024xf32>
    %c0_37 = arith.constant 0 : index
    %c0_38 = arith.constant 0 : index
    %93 = vector.load %arg6[%c0_37, %c0_38] : memref<8x1024xf32, #tpu.memory_space<vmem>>, vector<8x1024xf32>
    tpu.vector_store %arg6[%c0_37, %c0_38], %92 {strides = array<i32>} : memref<8x1024xf32, #tpu.memory_space<vmem>>, vector<8x1024xf32>,
    return
  }
  func.func @transform_0(%arg0: i32, %arg1: memref<1xi32, #tpu.memory_space<smem>>) -> (i32, i32) {
    %c0_i32 = arith.constant 0 : i32
    %c0_i32_0 = arith.constant 0 : i32
    return %arg0, %c0_i32 : i32, i32
  }
  func.func @transform_1(%arg0: i32, %arg1: memref<1xi32, #tpu.memory_space<smem>>) -> (i32, i32) {
    %c0_i32 = arith.constant 0 : i32
    %c0_i32_0 = arith.constant 0 : i32
    return %arg0, %c0_i32 : i32, i32
  }
  func.func @transform_2(%arg0: i32, %arg1: memref<1xi32, #tpu.memory_space<smem>>) -> (i32, i32) {
    %c0_i32 = arith.constant 0 : i32
    %c0_i32_0 = arith.constant 0 : i32
    return %arg0, %c0_i32 : i32, i32
  }
  func.func @transform_3(%arg0: i32, %arg1: memref<1xi32, #tpu.memory_space<smem>>) -> (i32, i32) {
    %c0_i32 = arith.constant 0 : i32
    %c0_i32_0 = arith.constant 0 : i32
    return %arg0, %c0_i32 : i32, i32
  }
  func.func @transform_4(%arg0: i32, %arg1: memref<1xi32, #tpu.memory_space<smem>>) -> (i32, i32) {
    %c0_i32 = arith.constant 0 : i32
    %c0_i32_0 = arith.constant 0 : i32
    return %arg0, %c0_i32 : i32, i32
  }
}

module attributes {stable_mosaic.version = 11 : i64} {
  func.func @_q_sample_kernel(%arg0: i32, %arg1: memref<8x1xf32, #tpu.memory_space<vmem>>, %arg2: memref<8x1xf32, #tpu.memory_space<vmem>>, %arg3: memref<8x1024xf32, #tpu.memory_space<vmem>>, %arg4: memref<8x1024xf32, #tpu.memory_space<vmem>>, %arg5: memref<8x1024xf32, #tpu.memory_space<vmem>>) attributes {dimension_semantics = [#tpu.dimension_semantics<parallel>], iteration_bounds = array<i64: 1>, scalar_prefetch = 0 : i64, scratch_operands = 0 : i64, tpu.core_type = #tpu.core_type<tc>, window_params = [{transform_indices = @transform_0, window_bounds = array<i64: 8, 1>}, {transform_indices = @transform_1, window_bounds = array<i64: 8, 1>}, {transform_indices = @transform_2, window_bounds = array<i64: 8, 1024>}, {transform_indices = @transform_3, window_bounds = array<i64: 8, 1024>}, {transform_indices = @transform_4, window_bounds = array<i64: 8, 1024>}]} {
    %c0 = arith.constant 0 : index
    %c0_0 = arith.constant 0 : index
    %0 = vector.load %arg3[%c0, %c0_0] : memref<8x1024xf32, #tpu.memory_space<vmem>>, vector<8x1024xf32>
    %c0_1 = arith.constant 0 : index
    %c0_2 = arith.constant 0 : index
    %1 = vector.load %arg4[%c0_1, %c0_2] : memref<8x1024xf32, #tpu.memory_space<vmem>>, vector<8x1024xf32>
    %c0_3 = arith.constant 0 : index
    %c0_4 = arith.constant 0 : index
    %2 = vector.load %arg1[%c0_3, %c0_4] : memref<8x1xf32, #tpu.memory_space<vmem>>, vector<8x1xf32>
    %3 = vector.broadcast %2 : vector<8x1xf32> to vector<8x1024xf32>
    %4 = arith.mulf %3, %0 : vector<8x1024xf32>
    %c0_5 = arith.constant 0 : index
    %c0_6 = arith.constant 0 : index
    %5 = vector.load %arg2[%c0_5, %c0_6] : memref<8x1xf32, #tpu.memory_space<vmem>>, vector<8x1xf32>
    %6 = vector.broadcast %5 : vector<8x1xf32> to vector<8x1024xf32>
    %7 = arith.mulf %6, %1 : vector<8x1024xf32>
    %8 = arith.addf %4, %7 : vector<8x1024xf32>
    %c0_7 = arith.constant 0 : index
    %c0_8 = arith.constant 0 : index
    %9 = vector.load %arg5[%c0_7, %c0_8] : memref<8x1024xf32, #tpu.memory_space<vmem>>, vector<8x1024xf32>
    tpu.vector_store %arg5[%c0_7, %c0_8], %8 {strides = array<i32>} : memref<8x1024xf32, #tpu.memory_space<vmem>>, vector<8x1024xf32>,
    return
  }
  func.func @transform_0(%arg0: i32) -> (i32, i32) {
    %c0_i32 = arith.constant 0 : i32
    %c0_i32_0 = arith.constant 0 : i32
    return %arg0, %c0_i32 : i32, i32
  }
  func.func @transform_1(%arg0: i32) -> (i32, i32) {
    %c0_i32 = arith.constant 0 : i32
    %c0_i32_0 = arith.constant 0 : i32
    return %arg0, %c0_i32 : i32, i32
  }
  func.func @transform_2(%arg0: i32) -> (i32, i32) {
    %c0_i32 = arith.constant 0 : i32
    %c0_i32_0 = arith.constant 0 : i32
    return %arg0, %c0_i32 : i32, i32
  }
  func.func @transform_3(%arg0: i32) -> (i32, i32) {
    %c0_i32 = arith.constant 0 : i32
    %c0_i32_0 = arith.constant 0 : i32
    return %arg0, %c0_i32 : i32, i32
  }
  func.func @transform_4(%arg0: i32) -> (i32, i32) {
    %c0_i32 = arith.constant 0 : i32
    %c0_i32_0 = arith.constant 0 : i32
    return %arg0, %c0_i32 : i32, i32
  }
}

</mosaic_0001>

<llo_original>
// kernel: tpu_custom_call.1
$region0: #{tpu_custom_call.1}
  #allocation0 [shape = 'u32[]', space=smem, size = 0x4, offset = 0x4, fixed_abs, tag = 'smem constant byte address 0x4 - core index']
  #allocation1 [shape = 'u32[144,128]{1,0:T(1,128)}', space=vmem, size = 0x12000, scoped, tag = 'internal scratch']
  #allocation2 [shape = 's32[1]{0}', space=sflag, size = 0x4, scoped, tag = 'scoped memory for tpu_custom_call.1']
  #allocation3 [shape = 's32[1]{0:T(128)S(6)}', space=smem, size = 0x200, scoped, tag = 'prefetched SMEM operand 0']
  %s0 = inlined_call_operand.<no memory space> [shape: s32[1], index: 0, kind: input, shape index: {}]
  %s1 = inlined_call_operand.vmem [shape: f32[8,1], index: 1, kind: input, shape index: {}]
  %s2 = inlined_call_operand.vmem [shape: f32[8,1], index: 2, kind: input, shape index: {}]
  %s3 = inlined_call_operand.hbm [shape: f32[8,1024], index: 3, kind: input, shape index: {}]
  %s4 = inlined_call_operand.hbm [shape: f32[8,1024], index: 4, kind: output, shape index: {0}]
  %s5 = inlined_call_operand.hbm [shape: f32[8,1024], index: 5, kind: output, shape index: {1}]
  %6 = xla_tuple %s4, %s5
  %s7 = sld [smem:[#allocation0]]
  $region34: #{tpu_custom_call.1} parent=0
    _
  %s9 = ssub.s32 1, %s7
  %s10 = scalar_select 0, %s9, %s7
  %11 = sst [smem:[#allocation3]] %s0
  $region1: #{tpu_custom_call.1} parent=0
    #allocation4 [shape = 'u8[32768]{0}', space=vmem, size = 0x8000, scoped, tag = 'input window, operand 3, single buffered']
    #allocation5 [shape = 's32[1]{0}', space=sflag, size = 0x4, scoped, tag = 'scoped memory for tpu_custom_call.1']
    #allocation6 [shape = 's32[1]{0}', space=sflag, size = 0x4, scoped, tag = 'scoped memory for tpu_custom_call.1']
    #allocation7 [shape = 'u8[32768]{0}', space=vmem, size = 0x8000, scoped, tag = 'output window, operand 0, single buffered']
    #allocation8 [shape = 'u8[32768]{0}', space=vmem, size = 0x8000, scoped, tag = 'output window, operand 1, single buffered']
    #allocation9 [shape = 's32[1]{0}', space=sflag, size = 0x4, scoped, tag = 'scoped memory for tpu_custom_call.1']
    %12 = vsyncpa [#allocation5], 0
    %13 = vsyncpa [#allocation6], 0
    %14 = vsyncpa [#allocation9], 0
    // Predicated region
    $region2: #{tpu_custom_call.1} parent=1 // pred_check
      _
    $region3: #{tpu_custom_call.1} parent=1 // pred_check_branch
      %16 = sbr.rel (0) target = $region5
    $region4: #{tpu_custom_call.1} parent=1 // pred_region
      _
    $region5: #{tpu_custom_call.1} parent=1 // pred_fallthru
      _
    // Predicated region
    $region6: #{tpu_custom_call.1} parent=1 // pred_check
      _
    $region7: #{tpu_custom_call.1} parent=1 // pred_check_branch
      %18 = sbr.rel (0) target = $region9
    $region8: #{tpu_custom_call.1} parent=1 // pred_region
      _
    $region9: #{tpu_custom_call.1} parent=1 // pred_fallthru
      _
    // Predicated region
    $region10: #{tpu_custom_call.1} parent=1 // pred_check
      _
    $region11: #{tpu_custom_call.1} parent=1 // pred_check_branch
      %20 = sbr.rel (0) target = $region13
    $region12: #{tpu_custom_call.1} parent=1 // pred_region
      %s22 = ssub.s32 1024, 1024
      %23 = vsyncadd [#allocation5], %s22
      %s25 = sshll.u32 [#allocation4], 4
      %s26 = int_to_ptr.vmem [resolvable:$true] %s25
      %28 = dma.hbm_to_vmem [thread:$0]  %s3, 1024, %s26, [#allocation5]
    $region13: #{tpu_custom_call.1} parent=1 // pred_fallthru
      _
    // Predicated region
    $region14: #{tpu_custom_call.1} parent=1 // pred_check
      _
    $region15: #{tpu_custom_call.1} parent=1 // pred_check_branch
      %30 = sbr.rel (0) target = $region17
    $region16: #{tpu_custom_call.1} parent=1 // pred_region
      %31 = dma.done [#allocation5], 1024
    $region17: #{tpu_custom_call.1} parent=1 // pred_fallthru
      _
    %s32 = sld [smem:[#allocation3]]
    %v33 = vlaneseq
    %v34 = vstv 0
    %v35 = vstv %s32
    %v36 = vxor.u32 %v34, %v35
    %v37 = vxor.u32 %v36, 466688986
    %v38 = vadd.s32 %v33, %v34
    %v39 = vadd.s32 %v33, %v35
    %v40 = vadd.s32 %v38, %v39
    %v41 = vshll.u32 %v39, 13
    %v42 = vshrl.u32 %v39, 19
    %v43 = vor.u32 %v41, %v42
    %v44 = vxor.u32 %v40, %v43
    %v45 = vadd.s32 %v40, %v44
    %v46 = vshll.u32 %v44, 15
    %v47 = vshrl.u32 %v44, 17
    %v48 = vor.u32 %v46, %v47
    %v49 = vxor.u32 %v45, %v48
    %v50 = vadd.s32 %v45, %v49
    %v51 = vshll.u32 %v49, 26
    %v52 = vshrl.u32 %v49, 6
    %v53 = vor.u32 %v51, %v52
    %v54 = vxor.u32 %v50, %v53
    %v55 = vadd.s32 %v50, %v54
    %v56 = vshll.u32 %v54, 6
    %v57 = vshrl.u32 %v54, 26
    %v58 = vor.u32 %v56, %v57
    %v59 = vxor.u32 %v55, %v58
    %v60 = vadd.s32 %v55, %v35
    %v61 = vadd.s32 %v59, %v37
    %v62 = vadd.s32 %v61, 1
    %v63 = vadd.s32 %v60, %v62
    %v64 = vshll.u32 %v62, 17
    %v65 = vshrl.u32 %v62, 15
    %v66 = vor.u32 %v64, %v65
    %v67 = vxor.u32 %v63, %v66
    %v68 = vadd.s32 %v63, %v67
    %v69 = vshll.u32 %v67, 29
    %v70 = vshrl.u32 %v67, 3
    %v71 = vor.u32 %v69, %v70
    %v72 = vxor.u32 %v68, %v71
    %v73 = vadd.s32 %v68, %v72
    %v74 = vshll.u32 %v72, 16
    %v75 = vshrl.u32 %v72, 16
    %v76 = vor.u32 %v74, %v75
    %v77 = vxor.u32 %v73, %v76
    %v78 = vadd.s32 %v73, %v77
    %v79 = vshll.u32 %v77, 24
    %v80 = vshrl.u32 %v77, 8
    %v81 = vor.u32 %v79, %v80
    %v82 = vxor.u32 %v78, %v81
    %v83 = vadd.s32 %v78, %v37
    %v84 = vadd.s32 %v82, %v34
    %v85 = vadd.s32 %v84, 2
    %v86 = vadd.s32 %v83, %v85
    %v87 = vshll.u32 %v85, 13
    %v88 = vshrl.u32 %v85, 19
    %v89 = vor.u32 %v87, %v88
    %v90 = vxor.u32 %v86, %v89
    %v91 = vadd.s32 %v86, %v90
    %v92 = vshll.u32 %v90, 15
    %v93 = vshrl.u32 %v90, 17
    %v94 = vor.u32 %v92, %v93
    %v95 = vxor.u32 %v91, %v94
    %v96 = vadd.s32 %v91, %v95
    %v97 = vshll.u32 %v95, 26
    %v98 = vshrl.u32 %v95, 6
    %v99 = vor.u32 %v97, %v98
    %v100 = vxor.u32 %v96, %v99
    %v101 = vadd.s32 %v96, %v100
    %v102 = vshll.u32 %v100, 6
    %v103 = vshrl.u32 %v100, 26
    %v104 = vor.u32 %v102, %v103
    %v105 = vxor.u32 %v101, %v104
    %v106 = vadd.s32 %v101, %v34
    %v107 = vadd.s32 %v105, %v35
    %v108 = vadd.s32 %v107, 3
    %v109 = vadd.s32 %v106, %v108
    %v110 = vshll.u32 %v108, 17
    %v111 = vshrl.u32 %v108, 15
    %v112 = vor.u32 %v110, %v111
    %v113 = vxor.u32 %v109, %v112
    %v114 = vadd.s32 %v109, %v113
    %v115 = vshll.u32 %v113, 29
    %v116 = vshrl.u32 %v113, 3
    %v117 = vor.u32 %v115, %v116
    %v118 = vxor.u32 %v114, %v117
    %v119 = vadd.s32 %v114, %v118
    %v120 = vshll.u32 %v118, 16
    %v121 = vshrl.u32 %v118, 16
    %v122 = vor.u32 %v120, %v121
    %v123 = vxor.u32 %v119, %v122
    %v124 = vadd.s32 %v119, %v123
    %v125 = vshll.u32 %v123, 24
    %v126 = vshrl.u32 %v123, 8
    %v127 = vor.u32 %v125, %v126
    %v128 = vxor.u32 %v124, %v127
    %v129 = vadd.s32 %v124, %v35
    %v130 = vadd.s32 %v128, %v37
    %v131 = vadd.s32 %v130, 4
    %v132 = vadd.s32 %v129, %v131
    %v133 = vshll.u32 %v131, 13
    %v134 = vshrl.u32 %v131, 19
    %v135 = vor.u32 %v133, %v134
    %v136 = vxor.u32 %v132, %v135
    %v137 = vadd.s32 %v132, %v136
    %v138 = vshll.u32 %v136, 15
    %v139 = vshrl.u32 %v136, 17
    %v140 = vor.u32 %v138, %v139
    %v141 = vxor.u32 %v137, %v140
    %v142 = vadd.s32 %v137, %v141
    %v143 = vshll.u32 %v141, 26
    %v144 = vshrl.u32 %v141, 6
    %v145 = vor.u32 %v143, %v144
    %v146 = vxor.u32 %v142, %v145
    %v147 = vadd.s32 %v142, %v146
    %v148 = vshll.u32 %v146, 6
    %v149 = vshrl.u32 %v146, 26
    %v150 = vor.u32 %v148, %v149
    %v151 = vxor.u32 %v147, %v150
    %v152 = vadd.s32 %v147, %v37
    %v153 = vadd.s32 %v151, %v34
    %v154 = vadd.s32 %v153, 5
    %v155 = vxor.u32 %v152, %v154
    %156 = set.rngseed %v155
    %v157 = vrng
    %v158 = vrng
    %v159 = vrng
    %v160 = vrng
    %v161 = vrng
    %v162 = vrng
    %v163 = vrng
    %v164 = vrng
    %v165 = vshrl.u32 %v157, 9
    %v166 = vshrl.u32 %v158, 9
    %v167 = vshrl.u32 %v159, 9
    %v168 = vshrl.u32 %v160, 9
    %v169 = vshrl.u32 %v161, 9
    %v170 = vshrl.u32 %v162, 9
    %v171 = vshrl.u32 %v163, 9
    %v172 = vshrl.u32 %v164, 9
    %v173 = vor.u32 %v165, 1065353216
    %v174 = vor.u32 %v166, 1065353216
    %v175 = vor.u32 %v167, 1065353216
    %v176 = vor.u32 %v168, 1065353216
    %v177 = vor.u32 %v169, 1065353216
    %v178 = vor.u32 %v170, 1065353216
    %v179 = vor.u32 %v171, 1065353216
    %v180 = vor.u32 %v172, 1065353216
    %v189 = vsub.f32 %v173, 1.0
    %v190 = vsub.f32 %v174, 1.0
    %v191 = vsub.f32 %v175, 1.0
    %v192 = vsub.f32 %v176, 1.0
    %v193 = vsub.f32 %v177, 1.0
    %v194 = vsub.f32 %v178, 1.0
    %v195 = vsub.f32 %v179, 1.0
    %v196 = vsub.f32 %v180, 1.0
    %v197 = vmul.f32 %v189, 2.0
    %v198 = vmul.f32 %v190, 2.0
    %v199 = vmul.f32 %v191, 2.0
    %v200 = vmul.f32 %v192, 2.0
    %v201 = vmul.f32 %v193, 2.0
    %v202 = vmul.f32 %v194, 2.0
    %v203 = vmul.f32 %v195, 2.0
    %v204 = vmul.f32 %v196, 2.0
    %v205 = vadd.f32 %v197, -0.99999994
    %v206 = vadd.f32 %v198, -0.99999994
    %v207 = vadd.f32 %v199, -0.99999994
    %v208 = vadd.f32 %v200, -0.99999994
    %v209 = vadd.f32 %v201, -0.99999994
    %v210 = vadd.f32 %v202, -0.99999994
    %v211 = vadd.f32 %v203, -0.99999994
    %v212 = vadd.f32 %v204, -0.99999994
    %v213 = vmax.f32 %v205, -0.99999994
    %v214 = vmax.f32 %v206, -0.99999994
    %v215 = vmax.f32 %v207, -0.99999994
    %v216 = vmax.f32 %v208, -0.99999994
    %v217 = vmax.f32 %v209, -0.99999994
    %v218 = vmax.f32 %v210, -0.99999994
    %v219 = vmax.f32 %v211, -0.99999994
    %v220 = vmax.f32 %v212, -0.99999994
    %v221 = vsub.f32 0.0, %v213
    %v222 = vsub.f32 0.0, %v214
    %v223 = vsub.f32 0.0, %v215
    %v224 = vsub.f32 0.0, %v216
    %v225 = vsub.f32 0.0, %v217
    %v226 = vsub.f32 0.0, %v218
    %v227 = vsub.f32 0.0, %v219
    %v228 = vsub.f32 0.0, %v220
    %v229 = vmul.f32 %v213, %v221
    %v230 = vmul.f32 %v214, %v222
    %v231 = vmul.f32 %v215, %v223
    %v232 = vmul.f32 %v216, %v224
    %v233 = vmul.f32 %v217, %v225
    %v234 = vmul.f32 %v218, %v226
    %v235 = vmul.f32 %v219, %v227
    %v236 = vmul.f32 %v220, %v228
    %v237 = vadd.f32 %v229, 1.0
    %v238 = vlog2.pop %v237
    %v239 = vmul.f32 %v238, 0.6931472
    %v240 = vmul.f32 -0.5, %v229
    %v241 = vadd.f32 %v240, 1.0
    %v242 = vmul.f32 %v241, %v229
    %v243 = vand.u32 2147483647, %v229
    %vm244 = vcmp.lt.f32.partialorder %v243, 0.0004427343
    %v245 = vsel %vm244, %v242, %v239
    %v246 = vadd.f32 %v230, 1.0
    %v247 = vlog2.pop %v246
    %v248 = vmul.f32 %v247, 0.6931472
    %v249 = vmul.f32 -0.5, %v230
    %v250 = vadd.f32 %v249, 1.0
    %v251 = vmul.f32 %v250, %v230
    %v252 = vand.u32 2147483647, %v230
    %vm253 = vcmp.lt.f32.partialorder %v252, 0.0004427343
    %v254 = vsel %vm253, %v251, %v248
    %v255 = vadd.f32 %v231, 1.0
    %v256 = vlog2.pop %v255
    %v257 = vmul.f32 %v256, 0.6931472
    %v258 = vmul.f32 -0.5, %v231
    %v259 = vadd.f32 %v258, 1.0
    %v260 = vmul.f32 %v259, %v231
    %v261 = vand.u32 2147483647, %v231
    %vm262 = vcmp.lt.f32.partialorder %v261, 0.0004427343
    %v263 = vsel %vm262, %v260, %v257
    %v264 = vadd.f32 %v232, 1.0
    %v265 = vlog2.pop %v264
    %v266 = vmul.f32 %v265, 0.6931472
    %v267 = vmul.f32 -0.5, %v232
    %v268 = vadd.f32 %v267, 1.0
    %v269 = vmul.f32 %v268, %v232
    %v270 = vand.u32 2147483647, %v232
    %vm271 = vcmp.lt.f32.partialorder %v270, 0.0004427343
    %v272 = vsel %vm271, %v269, %v266
    %v273 = vadd.f32 %v233, 1.0
    %v274 = vlog2.pop %v273
    %v275 = vmul.f32 %v274, 0.6931472
    %v276 = vmul.f32 -0.5, %v233
    %v277 = vadd.f32 %v276, 1.0
    %v278 = vmul.f32 %v277, %v233
    %v279 = vand.u32 2147483647, %v233
    %vm280 = vcmp.lt.f32.partialorder %v279, 0.0004427343
    %v281 = vsel %vm280, %v278, %v275
    %v282 = vadd.f32 %v234, 1.0
    %v283 = vlog2.pop %v282
    %v284 = vmul.f32 %v283, 0.6931472
    %v285 = vmul.f32 -0.5, %v234
    %v286 = vadd.f32 %v285, 1.0
    %v287 = vmul.f32 %v286, %v234
    %v288 = vand.u32 2147483647, %v234
    %vm289 = vcmp.lt.f32.partialorder %v288, 0.0004427343
    %v290 = vsel %vm289, %v287, %v284
    %v291 = vadd.f32 %v235, 1.0
    %v292 = vlog2.pop %v291
    %v293 = vmul.f32 %v292, 0.6931472
    %v294 = vmul.f32 -0.5, %v235
    %v295 = vadd.f32 %v294, 1.0
    %v296 = vmul.f32 %v295, %v235
    %v297 = vand.u32 2147483647, %v235
    %vm298 = vcmp.lt.f32.partialorder %v297, 0.0004427343
    %v299 = vsel %vm298, %v296, %v293
    %v300 = vadd.f32 %v236, 1.0
    %v301 = vlog2.pop %v300
    %v302 = vmul.f32 %v301, 0.6931472
    %v303 = vmul.f32 -0.5, %v236
    %v304 = vadd.f32 %v303, 1.0
    %v305 = vmul.f32 %v304, %v236
    %v306 = vand.u32 2147483647, %v236
    %vm307 = vcmp.lt.f32.partialorder %v306, 0.0004427343
    %v308 = vsel %vm307, %v305, %v302
    %v309 = vsub.f32 0.0, %v245
    %v310 = vsub.f32 0.0, %v254
    %v311 = vsub.f32 0.0, %v263
    %v312 = vsub.f32 0.0, %v272
    %v313 = vsub.f32 0.0, %v281
    %v314 = vsub.f32 0.0, %v290
    %v315 = vsub.f32 0.0, %v299
    %v316 = vsub.f32 0.0, %v308
    %vm317 = vcmp.lt.f32.partialorder %v309, 5.0
    %vm318 = vcmp.lt.f32.partialorder %v310, 5.0
    %vm319 = vcmp.lt.f32.partialorder %v311, 5.0
    %vm320 = vcmp.lt.f32.partialorder %v312, 5.0
    %vm321 = vcmp.lt.f32.partialorder %v313, 5.0
    %vm322 = vcmp.lt.f32.partialorder %v314, 5.0
    %vm323 = vcmp.lt.f32.partialorder %v315, 5.0
    %vm324 = vcmp.lt.f32.partialorder %v316, 5.0
    %v325 = vsub.f32 %v309, 2.5
    %v326 = vsub.f32 %v310, 2.5
    %v327 = vsub.f32 %v311, 2.5
    %v328 = vsub.f32 %v312, 2.5
    %v329 = vsub.f32 %v313, 2.5
    %v330 = vsub.f32 %v314, 2.5
    %v331 = vsub.f32 %v315, 2.5
    %v332 = vsub.f32 %v316, 2.5
    %v333 = vrsqrt.pop %v309
    %v334 = vmul.f32 %v309, %v333
    %vm335 = vcmp.eq.f32.partialorder %v309, inf
    %v336 = vsel %vm335, %v309, %v334
    %vm337 = vcmp.eq.f32.partialorder %v309, 0.0
    %v338 = vand.u32 %v309, 2147483648
    %v339 = vsel %vm337, %v338, %v336
    %v340 = vrsqrt.pop %v310
    %v341 = vmul.f32 %v310, %v340
    %vm342 = vcmp.eq.f32.partialorder %v310, inf
    %v343 = vsel %vm342, %v310, %v341
    %vm344 = vcmp.eq.f32.partialorder %v310, 0.0
    %v345 = vand.u32 %v310, 2147483648
    %v346 = vsel %vm344, %v345, %v343
    %v347 = vrsqrt.pop %v311
    %v348 = vmul.f32 %v311, %v347
    %vm349 = vcmp.eq.f32.partialorder %v311, inf
    %v350 = vsel %vm349, %v311, %v348
    %vm351 = vcmp.eq.f32.partialorder %v311, 0.0
    %v352 = vand.u32 %v311, 2147483648
    %v353 = vsel %vm351, %v352, %v350
    %v354 = vrsqrt.pop %v312
    %v355 = vmul.f32 %v312, %v354
    %vm356 = vcmp.eq.f32.partialorder %v312, inf
    %v357 = vsel %vm356, %v312, %v355
    %vm358 = vcmp.eq.f32.partialorder %v312, 0.0
    %v359 = vand.u32 %v312, 2147483648
    %v360 = vsel %vm358, %v359, %v357
    %v361 = vrsqrt.pop %v313
    %v362 = vmul.f32 %v313, %v361
    %vm363 = vcmp.eq.f32.partialorder %v313, inf
    %v364 = vsel %vm363, %v313, %v362
    %vm365 = vcmp.eq.f32.partialorder %v313, 0.0
    %v366 = vand.u32 %v313, 2147483648
    %v367 = vsel %vm365, %v366, %v364
    %v368 = vrsqrt.pop %v314
    %v369 = vmul.f32 %v314, %v368
    %vm370 = vcmp.eq.f32.partialorder %v314, inf
    %v371 = vsel %vm370, %v314, %v369
    %vm372 = vcmp.eq.f32.partialorder %v314, 0.0
    %v373 = vand.u32 %v314, 2147483648
    %v374 = vsel %vm372, %v373, %v371
    %v375 = vrsqrt.pop %v315
    %v376 = vmul.f32 %v315, %v375
    %vm377 = vcmp.eq.f32.partialorder %v315, inf
    %v378 = vsel %vm377, %v315, %v376
    %vm379 = vcmp.eq.f32.partialorder %v315, 0.0
    %v380 = vand.u32 %v315, 2147483648
    %v381 = vsel %vm379, %v380, %v378
    %v382 = vrsqrt.pop %v316
    %v383 = vmul.f32 %v316, %v382
    %vm384 = vcmp.eq.f32.partialorder %v316, inf
    %v385 = vsel %vm384, %v316, %v383
    %vm386 = vcmp.eq.f32.partialorder %v316, 0.0
    %v387 = vand.u32 %v316, 2147483648
    %v388 = vsel %vm386, %v387, %v385
    %v389 = vsub.f32 %v339, 3.0
    %v390 = vsub.f32 %v346, 3.0
    %v391 = vsub.f32 %v353, 3.0
    %v392 = vsub.f32 %v360, 3.0
    %v393 = vsub.f32 %v367, 3.0
    %v394 = vsub.f32 %v374, 3.0
    %v395 = vsub.f32 %v381, 3.0
    %v396 = vsub.f32 %v388, 3.0
    %v397 = vsel %vm317, %v325, %v389
    %v398 = vsel %vm318, %v326, %v390
    %v399 = vsel %vm319, %v327, %v391
    %v400 = vsel %vm320, %v328, %v392
    %v401 = vsel %vm321, %v329, %v393
    %v402 = vsel %vm322, %v330, %v394
    %v403 = vsel %vm323, %v331, %v395
    %v404 = vsel %vm324, %v332, %v396
    %v405 = vsel %vm317, 2.8102264e-08, -0.00020021426
    %v406 = vsel %vm318, 2.8102264e-08, -0.00020021426
    %v407 = vsel %vm319, 2.8102264e-08, -0.00020021426
    %v408 = vsel %vm320, 2.8102264e-08, -0.00020021426
    %v409 = vsel %vm321, 2.8102264e-08, -0.00020021426
    %v410 = vsel %vm322, 2.8102264e-08, -0.00020021426
    %v411 = vsel %vm323, 2.8102264e-08, -0.00020021426
    %v412 = vsel %vm324, 2.8102264e-08, -0.00020021426
    %v413 = vsel %vm317, 3.4327394e-07, 0.00010095056
    %v414 = vsel %vm318, 3.4327394e-07, 0.00010095056
    %v415 = vsel %vm319, 3.4327394e-07, 0.00010095056
    %v416 = vsel %vm320, 3.4327394e-07, 0.00010095056
    %v417 = vsel %vm321, 3.4327394e-07, 0.00010095056
    %v418 = vsel %vm322, 3.4327394e-07, 0.00010095056
    %v419 = vsel %vm323, 3.4327394e-07, 0.00010095056
    %v420 = vsel %vm324, 3.4327394e-07, 0.00010095056
    %v421 = vmul.f32 %v405, %v397
    %v422 = vmul.f32 %v406, %v398
    %v423 = vmul.f32 %v407, %v399
    %v424 = vmul.f32 %v408, %v400
    %v425 = vmul.f32 %v409, %v401
    %v426 = vmul.f32 %v410, %v402
    %v427 = vmul.f32 %v411, %v403
    %v428 = vmul.f32 %v412, %v404
    %v429 = vadd.f32 %v413, %v421
    %v430 = vadd.f32 %v414, %v422
    %v431 = vadd.f32 %v415, %v423
    %v432 = vadd.f32 %v416, %v424
    %v433 = vadd.f32 %v417, %v425
    %v434 = vadd.f32 %v418, %v426
    %v435 = vadd.f32 %v419, %v427
    %v436 = vadd.f32 %v420, %v428
    %v437 = vsel %vm317, -3.5233877e-06, 0.0013493432
    %v438 = vsel %vm318, -3.5233877e-06, 0.0013493432
    %v439 = vsel %vm319, -3.5233877e-06, 0.0013493432
    %v440 = vsel %vm320, -3.5233877e-06, 0.0013493432
    %v441 = vsel %vm321, -3.5233877e-06, 0.0013493432
    %v442 = vsel %vm322, -3.5233877e-06, 0.0013493432
    %v443 = vsel %vm323, -3.5233877e-06, 0.0013493432
    %v444 = vsel %vm324, -3.5233877e-06, 0.0013493432
    %v445 = vmul.f32 %v429, %v397
    %v446 = vmul.f32 %v430, %v398
    %v447 = vmul.f32 %v431, %v399
    %v448 = vmul.f32 %v432, %v400
    %v449 = vmul.f32 %v433, %v401
    %v450 = vmul.f32 %v434, %v402
    %v451 = vmul.f32 %v435, %v403
    %v452 = vmul.f32 %v436, %v404
    %v453 = vadd.f32 %v437, %v445
    %v454 = vadd.f32 %v438, %v446
    %v455 = vadd.f32 %v439, %v447
    %v456 = vadd.f32 %v440, %v448
    %v457 = vadd.f32 %v441, %v449
    %v458 = vadd.f32 %v442, %v450
    %v459 = vadd.f32 %v443, %v451
    %v460 = vadd.f32 %v444, %v452
    %v461 = vsel %vm317, -4.3915065e-06, -0.0036734284
    %v462 = vsel %vm318, -4.3915065e-06, -0.0036734284
    %v463 = vsel %vm319, -4.3915065e-06, -0.0036734284
    %v464 = vsel %vm320, -4.3915065e-06, -0.0036734284
    %v465 = vsel %vm321, -4.3915065e-06, -0.0036734284
    %v466 = vsel %vm322, -4.3915065e-06, -0.0036734284
    %v467 = vsel %vm323, -4.3915065e-06, -0.0036734284
    %v468 = vsel %vm324, -4.3915065e-06, -0.0036734284
    %v469 = vmul.f32 %v453, %v397
    %v470 = vmul.f32 %v454, %v398
    %v471 = vmul.f32 %v455, %v399
    %v472 = vmul.f32 %v456, %v400
    %v473 = vmul.f32 %v457, %v401
    %v474 = vmul.f32 %v458, %v402
    %v475 = vmul.f32 %v459, %v403
    %v476 = vmul.f32 %v460, %v404
    %v477 = vadd.f32 %v461, %v469
    %v478 = vadd.f32 %v462, %v470
    %v479 = vadd.f32 %v463, %v471
    %v480 = vadd.f32 %v464, %v472
    %v481 = vadd.f32 %v465, %v473
    %v482 = vadd.f32 %v466, %v474
    %v483 = vadd.f32 %v467, %v475
    %v484 = vadd.f32 %v468, %v476
    %v485 = vsel %vm317, 0.00021858087, 0.0057395077
    %v486 = vsel %vm318, 0.00021858087, 0.0057395077
    %v487 = vsel %vm319, 0.00021858087, 0.0057395077
    %v488 = vsel %vm320, 0.00021858087, 0.0057395077
    %v489 = vsel %vm321, 0.00021858087, 0.0057395077
    %v490 = vsel %vm322, 0.00021858087, 0.0057395077
    %v491 = vsel %vm323, 0.00021858087, 0.0057395077
    %v492 = vsel %vm324, 0.00021858087, 0.0057395077
    %v493 = vmul.f32 %v477, %v397
    %v494 = vmul.f32 %v478, %v398
    %v495 = vmul.f32 %v479, %v399
    %v496 = vmul.f32 %v480, %v400
    %v497 = vmul.f32 %v481, %v401
    %v498 = vmul.f32 %v482, %v402
    %v499 = vmul.f32 %v483, %v403
    %v500 = vmul.f32 %v484, %v404
    %v501 = vadd.f32 %v485, %v493
    %v502 = vadd.f32 %v486, %v494
    %v503 = vadd.f32 %v487, %v495
    %v504 = vadd.f32 %v488, %v496
    %v505 = vadd.f32 %v489, %v497
    %v506 = vadd.f32 %v490, %v498
    %v507 = vadd.f32 %v491, %v499
    %v508 = vadd.f32 %v492, %v500
    %v509 = vsel %vm317, -0.001253725, -0.0076224613
    %v510 = vsel %vm318, -0.001253725, -0.0076224613
    %v511 = vsel %vm319, -0.001253725, -0.0076224613
    %v512 = vsel %vm320, -0.001253725, -0.0076224613
    %v513 = vsel %vm321, -0.001253725, -0.0076224613
    %v514 = vsel %vm322, -0.001253725, -0.0076224613
    %v515 = vsel %vm323, -0.001253725, -0.0076224613
    %v516 = vsel %vm324, -0.001253725, -0.0076224613
    %v517 = vmul.f32 %v501, %v397
    %v518 = vmul.f32 %v502, %v398
    %v519 = vmul.f32 %v503, %v399
    %v520 = vmul.f32 %v504, %v400
    %v521 = vmul.f32 %v505, %v401
    %v522 = vmul.f32 %v506, %v402
    %v523 = vmul.f32 %v507, %v403
    %v524 = vmul.f32 %v508, %v404
    %v525 = vadd.f32 %v509, %v517
    %v526 = vadd.f32 %v510, %v518
    %v527 = vadd.f32 %v511, %v519
    %v528 = vadd.f32 %v512, %v520
    %v529 = vadd.f32 %v513, %v521
    %v530 = vadd.f32 %v514, %v522
    %v531 = vadd.f32 %v515, %v523
    %v532 = vadd.f32 %v516, %v524
    %v533 = vsel %vm317, -0.0041776816, 0.0094388705
    %v534 = vsel %vm318, -0.0041776816, 0.0094388705
    %v535 = vsel %vm319, -0.0041776816, 0.0094388705
    %v536 = vsel %vm320, -0.0041776816, 0.0094388705
    %v537 = vsel %vm321, -0.0041776816, 0.0094388705
    %v538 = vsel %vm322, -0.0041776816, 0.0094388705
    %v539 = vsel %vm323, -0.0041776816, 0.0094388705
    %v540 = vsel %vm324, -0.0041776816, 0.0094388705
    %v541 = vmul.f32 %v525, %v397
    %v542 = vmul.f32 %v526, %v398
    %v543 = vmul.f32 %v527, %v399
    %v544 = vmul.f32 %v528, %v400
    %v545 = vmul.f32 %v529, %v401
    %v546 = vmul.f32 %v530, %v402
    %v547 = vmul.f32 %v531, %v403
    %v548 = vmul.f32 %v532, %v404
    %v549 = vadd.f32 %v533, %v541
    %v550 = vadd.f32 %v534, %v542
    %v551 = vadd.f32 %v535, %v543
    %v552 = vadd.f32 %v536, %v544
    %v553 = vadd.f32 %v537, %v545
    %v554 = vadd.f32 %v538, %v546
    %v555 = vadd.f32 %v539, %v547
    %v556 = vadd.f32 %v540, %v548
    %v557 = vsel %vm317, 0.24664073, 1.001674
    %v558 = vsel %vm318, 0.24664073, 1.001674
    %v559 = vsel %vm319, 0.24664073, 1.001674
    %v560 = vsel %vm320, 0.24664073, 1.001674
    %v561 = vsel %vm321, 0.24664073, 1.001674
    %v562 = vsel %vm322, 0.24664073, 1.001674
    %v563 = vsel %vm323, 0.24664073, 1.001674
    %v564 = vsel %vm324, 0.24664073, 1.001674
    %v565 = vmul.f32 %v549, %v397
    %v566 = vmul.f32 %v550, %v398
    %v567 = vmul.f32 %v551, %v399
    %v568 = vmul.f32 %v552, %v400
    %v569 = vmul.f32 %v553, %v401
    %v570 = vmul.f32 %v554, %v402
    %v571 = vmul.f32 %v555, %v403
    %v572 = vmul.f32 %v556, %v404
    %v573 = vadd.f32 %v557, %v565
    %v574 = vadd.f32 %v558, %v566
    %v575 = vadd.f32 %v559, %v567
    %v576 = vadd.f32 %v560, %v568
    %v577 = vadd.f32 %v561, %v569
    %v578 = vadd.f32 %v562, %v570
    %v579 = vadd.f32 %v563, %v571
    %v580 = vadd.f32 %v564, %v572
    %v581 = vsel %vm317, 1.5014094, 2.8329768
    %v582 = vsel %vm318, 1.5014094, 2.8329768
    %v583 = vsel %vm319, 1.5014094, 2.8329768
    %v584 = vsel %vm320, 1.5014094, 2.8329768
    %v585 = vsel %vm321, 1.5014094, 2.8329768
    %v586 = vsel %vm322, 1.5014094, 2.8329768
    %v587 = vsel %vm323, 1.5014094, 2.8329768
    %v588 = vsel %vm324, 1.5014094, 2.8329768
    %v589 = vmul.f32 %v573, %v397
    %v590 = vmul.f32 %v574, %v398
    %v591 = vmul.f32 %v575, %v399
    %v592 = vmul.f32 %v576, %v400
    %v593 = vmul.f32 %v577, %v401
    %v594 = vmul.f32 %v578, %v402
    %v595 = vmul.f32 %v579, %v403
    %v596 = vmul.f32 %v580, %v404
    %v597 = vadd.f32 %v581, %v589
    %v598 = vadd.f32 %v582, %v590
    %v599 = vadd.f32 %v583, %v591
    %v600 = vadd.f32 %v584, %v592
    %v601 = vadd.f32 %v585, %v593
    %v602 = vadd.f32 %v586, %v594
    %v603 = vadd.f32 %v587, %v595
    %v604 = vadd.f32 %v588, %v596
    %v605 = vand.u32 2147483647, %v213
    %v606 = vand.u32 2147483647, %v214
    %v607 = vand.u32 2147483647, %v215
    %v608 = vand.u32 2147483647, %v216
    %v609 = vand.u32 2147483647, %v217
    %v610 = vand.u32 2147483647, %v218
    %v611 = vand.u32 2147483647, %v219
    %v612 = vand.u32 2147483647, %v220
    %vm613 = vcmp.eq.f32.partialorder %v605, 1.0
    %vm614 = vcmp.eq.f32.partialorder %v606, 1.0
    %vm615 = vcmp.eq.f32.partialorder %v607, 1.0
    %vm616 = vcmp.eq.f32.partialorder %v608, 1.0
    %vm617 = vcmp.eq.f32.partialorder %v609, 1.0
    %vm618 = vcmp.eq.f32.partialorder %v610, 1.0
    %vm619 = vcmp.eq.f32.partialorder %v611, 1.0
    %vm620 = vcmp.eq.f32.partialorder %v612, 1.0
    %v621 = vmul.f32 %v213, inf
    %v622 = vmul.f32 %v214, inf
    %v623 = vmul.f32 %v215, inf
    %v624 = vmul.f32 %v216, inf
    %v625 = vmul.f32 %v217, inf
    %v626 = vmul.f32 %v218, inf
    %v627 = vmul.f32 %v219, inf
    %v628 = vmul.f32 %v220, inf
    %v629 = vmul.f32 %v597, %v213
    %v630 = vmul.f32 %v598, %v214
    %v631 = vmul.f32 %v599, %v215
    %v632 = vmul.f32 %v600, %v216
    %v633 = vmul.f32 %v601, %v217
    %v634 = vmul.f32 %v602, %v218
    %v635 = vmul.f32 %v603, %v219
    %v636 = vmul.f32 %v604, %v220
    %v637 = vsel %vm613, %v621, %v629
    %v638 = vsel %vm614, %v622, %v630
    %v639 = vsel %vm615, %v623, %v631
    %v640 = vsel %vm616, %v624, %v632
    %v641 = vsel %vm617, %v625, %v633
    %v642 = vsel %vm618, %v626, %v634
    %v643 = vsel %vm619, %v627, %v635
    %v644 = vsel %vm620, %v628, %v636
    %v645 = vmul.f32 %v637, 1.4142135
    %v646 = vmul.f32 %v638, 1.4142135
    %v647 = vmul.f32 %v639, 1.4142135
    %v648 = vmul.f32 %v640, 1.4142135
    %v649 = vmul.f32 %v641, 1.4142135
    %v650 = vmul.f32 %v642, 1.4142135
    %v651 = vmul.f32 %v643, 1.4142135
    %v652 = vmul.f32 %v644, 1.4142135
    %653 = vst [vmem:[#allocation7] sm:$0xff] %v645
    %654 = vst [vmem:[#allocation7 + $0x8] sm:$0xff] %v646
    %655 = vst [vmem:[#allocation7 + $0x10] sm:$0xff] %v647
    %656 = vst [vmem:[#allocation7 + $0x18] sm:$0xff] %v648
    %657 = vst [vmem:[#allocation7 + $0x20] sm:$0xff] %v649
    %658 = vst [vmem:[#allocation7 + $0x28] sm:$0xff] %v650
    %659 = vst [vmem:[#allocation7 + $0x30] sm:$0xff] %v651
    %660 = vst [vmem:[#allocation7 + $0x38] sm:$0xff] %v652
    %v661 = vld [vmem:[#allocation4] sm:$0xff]
    %v662 = vld [vmem:[#allocation4 + $0x8] sm:$0xff]
    %v663 = vld [vmem:[#allocation4 + $0x10] sm:$0xff]
    %v664 = vld [vmem:[#allocation4 + $0x18] sm:$0xff]
    %v665 = vld [vmem:[#allocation4 + $0x20] sm:$0xff]
    %v666 = vld [vmem:[#allocation4 + $0x28] sm:$0xff]
    %v667 = vld [vmem:[#allocation4 + $0x30] sm:$0xff]
    %v668 = vld [vmem:[#allocation4 + $0x38] sm:$0xff]
    %v669 = vld [vmem:[%s1] sm:$0xff]
    %671 = vset.pattern.permute.xlu0 0
    %672 = vperm.xlu0 %671, %v669
    %v673 = vpop.permute.xlu0 %672
    %v675 = vmul.f32 %v673, %v661
    %v676 = vmul.f32 %v673, %v662
    %v677 = vmul.f32 %v673, %v663
    %v678 = vmul.f32 %v673, %v664
    %v679 = vmul.f32 %v673, %v665
    %v680 = vmul.f32 %v673, %v666
    %v681 = vmul.f32 %v673, %v667
    %v682 = vmul.f32 %v673, %v668
    %v683 = vld [vmem:[%s2] sm:$0xff]
    %685 = vset.pattern.permute.xlu0 0
    %686 = vperm.xlu0 %685, %v683
    %v687 = vpop.permute.xlu0 %686
    %v689 = vmul.f32 %v687, %v645
    %v690 = vmul.f32 %v687, %v646
    %v691 = vmul.f32 %v687, %v647
    %v692 = vmul.f32 %v687, %v648
    %v693 = vmul.f32 %v687, %v649
    %v694 = vmul.f32 %v687, %v650
    %v695 = vmul.f32 %v687, %v651
    %v696 = vmul.f32 %v687, %v652
    %v697 = vadd.f32 %v675, %v689
    %v698 = vadd.f32 %v676, %v690
    %v699 = vadd.f32 %v677, %v691
    %v700 = vadd.f32 %v678, %v692
    %v701 = vadd.f32 %v679, %v693
    %v702 = vadd.f32 %v680, %v694
    %v703 = vadd.f32 %v681, %v695
    %v704 = vadd.f32 %v682, %v696
    %705 = vst [vmem:[#allocation8] sm:$0xff] %v697
    %706 = vst [vmem:[#allocation8 + $0x8] sm:$0xff] %v698
    %707 = vst [vmem:[#allocation8 + $0x10] sm:$0xff] %v699
    %708 = vst [vmem:[#allocation8 + $0x18] sm:$0xff] %v700
    %709 = vst [vmem:[#allocation8 + $0x20] sm:$0xff] %v701
    %710 = vst [vmem:[#allocation8 + $0x28] sm:$0xff] %v702
    %711 = vst [vmem:[#allocation8 + $0x30] sm:$0xff] %v703
    %712 = vst [vmem:[#allocation8 + $0x38] sm:$0xff] %v704
    // Predicated region
    $region18: #{tpu_custom_call.1} parent=1 // pred_check
      _
    $region19: #{tpu_custom_call.1} parent=1 // pred_check_branch
      %714 = sbr.rel (0) target = $region21
    $region20: #{tpu_custom_call.1} parent=1 // pred_region
      %s716 = ssub.s32 1024, 1024
      %717 = vsyncadd [#allocation6], %s716
      %s719 = sshll.u32 [#allocation7], 4
      %s720 = int_to_ptr.vmem [resolvable:$true] %s719
      %722 = dma.vmem_to_hbm [thread:$0]  %s720, 1024, %s4, [#allocation6]
    $region21: #{tpu_custom_call.1} parent=1 // pred_fallthru
      _
    // Predicated region
    $region22: #{tpu_custom_call.1} parent=1 // pred_check
      _
    $region23: #{tpu_custom_call.1} parent=1 // pred_check_branch
      %724 = sbr.rel (0) target = $region25
    $region24: #{tpu_custom_call.1} parent=1 // pred_region
      %s726 = ssub.s32 1024, 1024
      %727 = vsyncadd [#allocation9], %s726
      %s729 = sshll.u32 [#allocation8], 4
      %s730 = int_to_ptr.vmem [resolvable:$true] %s729
      %732 = dma.vmem_to_hbm [thread:$0]  %s730, 1024, %s5, [#allocation9]
    $region25: #{tpu_custom_call.1} parent=1 // pred_fallthru
      _
    // Predicated region
    $region26: #{tpu_custom_call.1} parent=1 // pred_check
      _
    $region27: #{tpu_custom_call.1} parent=1 // pred_check_branch
      %734 = sbr.rel (0) target = $region29
    $region28: #{tpu_custom_call.1} parent=1 // pred_region
      %735 = dma.done [#allocation6], 1024
    $region29: #{tpu_custom_call.1} parent=1 // pred_fallthru
      _
    // Predicated region
    $region30: #{tpu_custom_call.1} parent=1 // pred_check
      _
    $region31: #{tpu_custom_call.1} parent=1 // pred_check_branch
      %737 = sbr.rel (0) target = $region33
    $region32: #{tpu_custom_call.1} parent=1 // pred_region
      %738 = dma.done [#allocation9], 1024
    $region33: #{tpu_custom_call.1} parent=1 // pred_fallthru
      _
    %739 = vsyncpa [#allocation5], 1
    %740 = vsyncpa [#allocation6], 1
    %741 = vsyncpa [#allocation9], 1

// kernel: tpu_custom_call.1
$region0: #{tpu_custom_call.1}
  #allocation0 [shape = 'u32[]', space=smem, size = 0x4, offset = 0x4, fixed_abs, tag = 'smem constant byte address 0x4 - core index']
  #allocation1 [shape = 'u32[144,128]{1,0:T(1,128)}', space=vmem, size = 0x12000, scoped, tag = 'internal scratch']
  %s0 = inlined_call_operand.vmem [shape: f32[8,1], index: 0, kind: input, shape index: {}]
  %s1 = inlined_call_operand.vmem [shape: f32[8,1], index: 1, kind: input, shape index: {}]
  %s2 = inlined_call_operand.hbm [shape: f32[8,1024], index: 2, kind: input, shape index: {}]
  %s3 = inlined_call_operand.hbm [shape: f32[8,1024], index: 3, kind: input, shape index: {}]
  %s4 = inlined_call_operand.hbm [shape: f32[8,1024], index: 4, kind: output, shape index: {}]
  %s5 = sld [smem:[#allocation0]]
  $region34: #{tpu_custom_call.1} parent=0
    _
  %s7 = ssub.s32 1, %s5
  %s8 = scalar_select 0, %s7, %s5
  $region1: #{tpu_custom_call.1} parent=0
    #allocation2 [shape = 'u8[32768]{0}', space=vmem, size = 0x8000, scoped, tag = 'input window, operand 2, single buffered']
    #allocation3 [shape = 's32[1]{0}', space=sflag, size = 0x4, scoped, tag = 'scoped memory for tpu_custom_call.1']
    #allocation4 [shape = 's32[1]{0}', space=sflag, size = 0x4, scoped, tag = 'scoped memory for tpu_custom_call.1']
    #allocation5 [shape = 'u8[32768]{0}', space=vmem, size = 0x8000, scoped, tag = 'input window, operand 3, single buffered']
    #allocation6 [shape = 's32[1]{0}', space=sflag, size = 0x4, scoped, tag = 'scoped memory for tpu_custom_call.1']
    #allocation7 [shape = 'u8[32768]{0}', space=vmem, size = 0x8000, scoped, tag = 'output window, operand 0, single buffered']
    %9 = vsyncpa [#allocation3], 0
    %10 = vsyncpa [#allocation6], 0
    %11 = vsyncpa [#allocation4], 0
    // Predicated region
    $region2: #{tpu_custom_call.1} parent=1 // pred_check
      _
    $region3: #{tpu_custom_call.1} parent=1 // pred_check_branch
      %13 = sbr.rel (0) target = $region5
    $region4: #{tpu_custom_call.1} parent=1 // pred_region
      _
    $region5: #{tpu_custom_call.1} parent=1 // pred_fallthru
      _
    // Predicated region
    $region6: #{tpu_custom_call.1} parent=1 // pred_check
      _
    $region7: #{tpu_custom_call.1} parent=1 // pred_check_branch
      %15 = sbr.rel (0) target = $region9
    $region8: #{tpu_custom_call.1} parent=1 // pred_region
      _
    $region9: #{tpu_custom_call.1} parent=1 // pred_fallthru
      _
    // Predicated region
    $region10: #{tpu_custom_call.1} parent=1 // pred_check
      _
    $region11: #{tpu_custom_call.1} parent=1 // pred_check_branch
      %17 = sbr.rel (0) target = $region13
    $region12: #{tpu_custom_call.1} parent=1 // pred_region
      %s19 = ssub.s32 1024, 1024
      %20 = vsyncadd [#allocation3], %s19
      %s22 = sshll.u32 [#allocation2], 4
      %s23 = int_to_ptr.vmem [resolvable:$true] %s22
      %25 = dma.hbm_to_vmem [thread:$0]  %s2, 1024, %s23, [#allocation3]
    $region13: #{tpu_custom_call.1} parent=1 // pred_fallthru
      _
    // Predicated region
    $region14: #{tpu_custom_call.1} parent=1 // pred_check
      _
    $region15: #{tpu_custom_call.1} parent=1 // pred_check_branch
      %27 = sbr.rel (0) target = $region17
    $region16: #{tpu_custom_call.1} parent=1 // pred_region
      %s29 = ssub.s32 1024, 1024
      %30 = vsyncadd [#allocation6], %s29
      %s32 = sshll.u32 [#allocation5], 4
      %s33 = int_to_ptr.vmem [resolvable:$true] %s32
      %35 = dma.hbm_to_vmem [thread:$0]  %s3, 1024, %s33, [#allocation6]
    $region17: #{tpu_custom_call.1} parent=1 // pred_fallthru
      _
    // Predicated region
    $region18: #{tpu_custom_call.1} parent=1 // pred_check
      _
    $region19: #{tpu_custom_call.1} parent=1 // pred_check_branch
      %37 = sbr.rel (0) target = $region21
    $region20: #{tpu_custom_call.1} parent=1 // pred_region
      %38 = dma.done [#allocation3], 1024
    $region21: #{tpu_custom_call.1} parent=1 // pred_fallthru
      _
    // Predicated region
    $region22: #{tpu_custom_call.1} parent=1 // pred_check
      _
    $region23: #{tpu_custom_call.1} parent=1 // pred_check_branch
      %40 = sbr.rel (0) target = $region25
    $region24: #{tpu_custom_call.1} parent=1 // pred_region
      %41 = dma.done [#allocation6], 1024
    $region25: #{tpu_custom_call.1} parent=1 // pred_fallthru
      _
    %v42 = vld [vmem:[#allocation2] sm:$0xff]
    %v43 = vld [vmem:[#allocation2 + $0x8] sm:$0xff]
    %v44 = vld [vmem:[#allocation2 + $0x10] sm:$0xff]
    %v45 = vld [vmem:[#allocation2 + $0x18] sm:$0xff]
    %v46 = vld [vmem:[#allocation2 + $0x20] sm:$0xff]
    %v47 = vld [vmem:[#allocation2 + $0x28] sm:$0xff]
    %v48 = vld [vmem:[#allocation2 + $0x30] sm:$0xff]
    %v49 = vld [vmem:[#allocation2 + $0x38] sm:$0xff]
    %v50 = vld [vmem:[#allocation5] sm:$0xff]
    %v51 = vld [vmem:[#allocation5 + $0x8] sm:$0xff]
    %v52 = vld [vmem:[#allocation5 + $0x10] sm:$0xff]
    %v53 = vld [vmem:[#allocation5 + $0x18] sm:$0xff]
    %v54 = vld [vmem:[#allocation5 + $0x20] sm:$0xff]
    %v55 = vld [vmem:[#allocation5 + $0x28] sm:$0xff]
    %v56 = vld [vmem:[#allocation5 + $0x30] sm:$0xff]
    %v57 = vld [vmem:[#allocation5 + $0x38] sm:$0xff]
    %v58 = vld [vmem:[%s0] sm:$0xff]
    %60 = vset.pattern.permute.xlu0 0
    %61 = vperm.xlu0 %60, %v58
    %v62 = vpop.permute.xlu0 %61
    %v64 = vmul.f32 %v62, %v42
    %v65 = vmul.f32 %v62, %v43
    %v66 = vmul.f32 %v62, %v44
    %v67 = vmul.f32 %v62, %v45
    %v68 = vmul.f32 %v62, %v46
    %v69 = vmul.f32 %v62, %v47
    %v70 = vmul.f32 %v62, %v48
    %v71 = vmul.f32 %v62, %v49
    %v72 = vld [vmem:[%s1] sm:$0xff]
    %74 = vset.pattern.permute.xlu0 0
    %75 = vperm.xlu0 %74, %v72
    %v76 = vpop.permute.xlu0 %75
    %v78 = vmul.f32 %v76, %v50
    %v79 = vmul.f32 %v76, %v51
    %v80 = vmul.f32 %v76, %v52
    %v81 = vmul.f32 %v76, %v53
    %v82 = vmul.f32 %v76, %v54
    %v83 = vmul.f32 %v76, %v55
    %v84 = vmul.f32 %v76, %v56
    %v85 = vmul.f32 %v76, %v57
    %v86 = vadd.f32 %v64, %v78
    %v87 = vadd.f32 %v65, %v79
    %v88 = vadd.f32 %v66, %v80
    %v89 = vadd.f32 %v67, %v81
    %v90 = vadd.f32 %v68, %v82
    %v91 = vadd.f32 %v69, %v83
    %v92 = vadd.f32 %v70, %v84
    %v93 = vadd.f32 %v71, %v85
    %94 = vst [vmem:[#allocation7] sm:$0xff] %v86
    %95 = vst [vmem:[#allocation7 + $0x8] sm:$0xff] %v87
    %96 = vst [vmem:[#allocation7 + $0x10] sm:$0xff] %v88
    %97 = vst [vmem:[#allocation7 + $0x18] sm:$0xff] %v89
    %98 = vst [vmem:[#allocation7 + $0x20] sm:$0xff] %v90
    %99 = vst [vmem:[#allocation7 + $0x28] sm:$0xff] %v91
    %100 = vst [vmem:[#allocation7 + $0x30] sm:$0xff] %v92
    %101 = vst [vmem:[#allocation7 + $0x38] sm:$0xff] %v93
    // Predicated region
    $region26: #{tpu_custom_call.1} parent=1 // pred_check
      _
    $region27: #{tpu_custom_call.1} parent=1 // pred_check_branch
      %103 = sbr.rel (0) target = $region29
    $region28: #{tpu_custom_call.1} parent=1 // pred_region
      %s105 = ssub.s32 1024, 1024
      %106 = vsyncadd [#allocation4], %s105
      %s108 = sshll.u32 [#allocation7], 4
      %s109 = int_to_ptr.vmem [resolvable:$true] %s108
      %111 = dma.vmem_to_hbm [thread:$0]  %s109, 1024, %s4, [#allocation4]
    $region29: #{tpu_custom_call.1} parent=1 // pred_fallthru
      _
    // Predicated region
    $region30: #{tpu_custom_call.1} parent=1 // pred_check
      _
    $region31: #{tpu_custom_call.1} parent=1 // pred_check_branch
      %113 = sbr.rel (0) target = $region33
    $region32: #{tpu_custom_call.1} parent=1 // pred_region
      %114 = dma.done [#allocation4], 1024
    $region33: #{tpu_custom_call.1} parent=1 // pred_fallthru
      _
    %115 = vsyncpa [#allocation3], 1
    %116 = vsyncpa [#allocation6], 1
    %117 = vsyncpa [#allocation4], 1

</llo_original>
